<compile_context>
chip_gen: v7x
topology: tpu7x:2x2x1
jax: 0.10.0
libtpu: 0.0.40
codegen_flags: <defaults>
</compile_context>

<pallas_src>
import functools
import math

import jax
import jax.numpy as jnp
from jax.experimental import pallas as pl
from jax.experimental.pallas import tpu as pltpu


def rmsnorm_kernel(x_ref, w_ref, o_ref, *, eps, chunk):
    # x_ref: (tile_m, D)   w_ref: (1, D)   o_ref: (tile_m, D)
    w = w_ref[...]
    n_chunks = x_ref.shape[0] // chunk

    @pl.loop(0, n_chunks)
    def _(c):
        r = pl.multiple_of(c * chunk, chunk)
        x = x_ref[pl.ds(r, chunk), :].astype(jnp.float32)
        var = jnp.mean(x * x, axis=-1, keepdims=True)
        # Match torch: cast back to the input dtype *before* the weight multiply,
        # then let the multiply promote (weight may be fp32 with bf16 inputs).
        normed = (x * jax.lax.rsqrt(var + eps)).astype(x_ref.dtype)
        o_ref[pl.ds(r, chunk), :] = (w * normed).astype(o_ref.dtype)


def _round_up(a, b):
    return (a + b - 1) // b * b


def rmsnorm_forward(x, weight, eps=1e-6):
    """x: (..., D). weight: (D,). Output dtype follows torch promotion rules."""
    orig_shape = x.shape
    D = orig_shape[-1]
    M = math.prod(orig_shape[:-1]) if len(orig_shape) > 1 else 1
    x2 = x.reshape(M, D)
    w2 = weight.reshape(1, D)

    out_dtype = jnp.promote_types(x.dtype, weight.dtype)

    # ---- Tile sizing --------------------------------------------------------
    # Double-buffered input + output block per grid step, real itemsizes.
    budget = 20 * 1024 * 1024                      # ~60% of the 32 MiB scoped VMEM
    bytes_per_row = D * (x.dtype.itemsize + jnp.dtype(out_dtype).itemsize) * 2
    max_rows = max(8, budget // bytes_per_row)
    tile_m = min(4096, max_rows)
    # Keep at least 2 grid steps so v7x's two TensorCores both get rows
    # (harmless on single-TC v5e/v6e).
    tile_m = min(tile_m, _round_up(pl.cdiv(M, 2), 8))
    tile_m = max(8, (tile_m // 8) * 8)
    # In-kernel sub-chunk size (bounds f32 live ranges, esp. on v5e).
    chunk = 256 if tile_m >= 256 else tile_m
    tile_m = (tile_m // chunk) * chunk

    grid = (pl.cdiv(M, tile_m),)                   # ragged last block, no padding

    cost = pl.CostEstimate(
        flops=4 * M * D,
        transcendentals=M,
        bytes_accessed=M * D * (x.dtype.itemsize + jnp.dtype(out_dtype).itemsize)
        + D * weight.dtype.itemsize,
    )

    out = pl.pallas_call(
        functools.partial(rmsnorm_kernel, eps=eps, chunk=chunk),
        out_shape=jax.ShapeDtypeStruct((M, D), out_dtype),
        grid_spec=pltpu.PrefetchScalarGridSpec(
            num_scalar_prefetch=0,
            grid=grid,
            in_specs=[
                pl.BlockSpec((tile_m, D), lambda i: (i, 0)),  # row tile
                pl.BlockSpec((1, D), lambda i: (0, 0)),       # weight, reused
            ],
            out_specs=pl.BlockSpec((tile_m, D), lambda i: (i, 0)),
        ),
        compiler_params=pltpu.CompilerParams(
            dimension_semantics=("parallel",),     # rows independent -> megacore
            vmem_limit_bytes=32 * 1024 * 1024,     # safe on v7x (64 MiB physical)
        ),
        cost_estimate=cost,
    )(x2, w2)

    return out.reshape(orig_shape[:-1] + (D,))


def reference_rmsnorm(x, weight, eps=1e-6):
    xf = x.astype(jnp.float32)
    var = jnp.mean(xf * xf, axis=-1, keepdims=True)
    normed = (xf * jax.lax.rsqrt(var + eps)).astype(x.dtype)
    return weight * normed


if __name__ == "__main__":
    # Small shapes consistent with the module's forward: (batch, seq, hidden).
    B, S, D = 2, 8, 128
    eps = 1e-6

    key = jax.random.PRNGKey(0)
    kx, kw = jax.random.split(key, 2)

    x = jax.random.normal(kx, (B, S, D), dtype=jnp.float32)
    # Module initializes weight to ones; perturb deterministically so the
    # scale multiply is actually exercised.
    weight = 1.0 + 0.1 * jax.random.normal(kw, (D,), dtype=jnp.float32)

    out = jax.block_until_ready(rmsnorm_forward(x, weight, eps))
    ref = jax.block_until_ready(reference_rmsnorm(x, weight, eps))

    assert out.shape == x.shape, out.shape
    assert out.dtype == x.dtype, out.dtype
    assert jnp.allclose(out, ref, atol=1e-5, rtol=1e-5), \
        float(jnp.max(jnp.abs(out - ref)))

    print("KERNEL_OK")
</pallas_src>

<mosaic_0001>
module attributes {stable_mosaic.version = 11 : i64} {
  func.func @rmsnorm_kernel(%arg0: i32, %arg1: memref<8x128xf32, #tpu.memory_space<vmem>>, %arg2: memref<1x128xf32, #tpu.memory_space<vmem>>, %arg3: memref<8x128xf32, #tpu.memory_space<vmem>>) attributes {dimension_semantics = [#tpu.dimension_semantics<parallel>], iteration_bounds = array<i64: 2>, scalar_prefetch = 0 : i64, scratch_operands = 0 : i64, tpu.core_type = #tpu.core_type<tc>, window_params = [{transform_indices = @transform_0, window_bounds = array<i64: 8, 128>}, {pipeline_mode = #tpu.pipeline_mode<synchronous>, transform_indices = @transform_1, window_bounds = array<i64: 1, 128>}, {transform_indices = @transform_2, window_bounds = array<i64: 8, 128>}]} {
    %c0 = arith.constant 0 : index
    %c0_0 = arith.constant 0 : index
    %0 = vector.load %arg2[%c0, %c0_0] : memref<1x128xf32, #tpu.memory_space<vmem>>, vector<1x128xf32>
    %c0_i32 = arith.constant 0 : i32
    %c1_i32 = arith.constant 1 : i32
    %1 = arith.muli %c0_i32, %c1_i32 : i32
    %c0_i32_1 = arith.constant 0 : i32
    %2 = arith.addi %c0_i32_1, %1 : i32
    %c8_i32 = arith.constant 8 : i32
    %3 = arith.muli %2, %c8_i32 : i32
    %4 = tpu.assume_multiple %3, 8 : i32
    %5 = arith.index_cast %4 : i32 to index
    %c0_2 = arith.constant 0 : index
    %6 = vector.load %arg1[%5, %c0_2] : memref<8x128xf32, #tpu.memory_space<vmem>>, vector<8x128xf32>
    %7 = arith.mulf %6, %6 : vector<8x128xf32>
    %cst = arith.constant dense<0.000000e+00> : vector<8xf32>
    %8 = vector.multi_reduction <add>, %7, %cst [1] : vector<8x128xf32> to vector<8xf32>
    %9 = vector.shape_cast %8 : vector<8xf32> to vector<8x1xf32>
    %cst_3 = arith.constant 1.280000e+02 : f32
    %10 = vector.broadcast %cst_3 : f32 to vector<8x1xf32>
    %11 = arith.divf %9, %10 : vector<8x1xf32>
    %cst_4 = arith.constant 9.99999997E-7 : f32
    %12 = vector.broadcast %cst_4 : f32 to vector<8x1xf32>
    %13 = arith.addf %11, %12 : vector<8x1xf32>
    %14 = math.rsqrt %13 : vector<8x1xf32>
    %15 = vector.broadcast %14 : vector<8x1xf32> to vector<8x128xf32>
    %16 = arith.mulf %6, %15 : vector<8x128xf32>
    %17 = vector.broadcast %0 : vector<1x128xf32> to vector<8x128xf32>
    %18 = arith.mulf %17, %16 : vector<8x128xf32>
    %19 = arith.index_cast %4 : i32 to index
    %c0_5 = arith.constant 0 : index
    %20 = vector.load %arg3[%19, %c0_5] : memref<8x128xf32, #tpu.memory_space<vmem>>, vector<8x128xf32>
    tpu.vector_store %arg3[%19, %c0_5], %18 {strides = array<i32>} : memref<8x128xf32, #tpu.memory_space<vmem>>, vector<8x128xf32>,
    %c1_i32_6 = arith.constant 1 : i32
    return
  }
  func.func @transform_0(%arg0: i32) -> (i32, i32) {
    %c0_i32 = arith.constant 0 : i32
    %c0_i32_0 = arith.constant 0 : i32
    return %arg0, %c0_i32 : i32, i32
  }
  func.func @transform_1(%arg0: i32) -> (i32, i32) {
    %c0_i32 = arith.constant 0 : i32
    %c0_i32_0 = arith.constant 0 : i32
    %c0_i32_1 = arith.constant 0 : i32
    return %c0_i32, %c0_i32_0 : i32, i32
  }
  func.func @transform_2(%arg0: i32) -> (i32, i32) {
    %c0_i32 = arith.constant 0 : i32
    %c0_i32_0 = arith.constant 0 : i32
    return %arg0, %c0_i32 : i32, i32
  }
}

</mosaic_0001>

<llo_original>
// kernel: tpu_custom_call.1
$region0: #{tpu_custom_call.1}
  #allocation0 [shape = 'u32[]', space=smem, size = 0x4, offset = 0x4, fixed_abs, tag = 'smem constant byte address 0x4 - core index']
  #allocation1 [shape = 'u32[144,128]{1,0:T(1,128)}', space=vmem, size = 0x12000, scoped, tag = 'internal scratch']
  %s0 = inlined_call_operand.hbm [shape: f32[16,128], index: 0, kind: input, shape index: {}]
  %s1 = inlined_call_operand.vmem [shape: f32[1,128], index: 1, kind: input, shape index: {}]
  %s2 = inlined_call_operand.hbm [shape: f32[16,128], index: 2, kind: output, shape index: {}]
  %s3 = sld [smem:[#allocation0]]
  $region45: #{tpu_custom_call.1} parent=0
    _
  %s5 = ssub.s32 1, %s3
  %s6 = scalar_select 0, %s5, %s3
  $region1: #{tpu_custom_call.1} parent=0
    #allocation2 [shape = 'u8[8192]{0}', space=vmem, size = 0x2000, scoped, tag = 'input window, operand 0']
    #allocation3 [shape = 's32[2]{0}', space=sflag, size = 0x8, scoped, tag = 'scoped memory for tpu_custom_call.1']
    #allocation4 [shape = 's32[2]{0}', space=sflag, size = 0x8, scoped, tag = 'scoped memory for tpu_custom_call.1']
    #allocation5 [shape = 'u8[8192]{0}', space=vmem, size = 0x2000, scoped, tag = 'output window, operand 0']
    %7 = vsyncpa [#allocation3], 0
    %s8 = scalar_lea.sflag [#allocation3], 1
    %9 = vsyncpa %s8, 0
    %10 = vsyncpa [#allocation4], 0
    %s11 = scalar_lea.sflag [#allocation4], 1
    %12 = vsyncpa %s11, 0
    loop: start=0, step=1, limit=4
    $region2: #{tpu_custom_call.1} parent=1 // loop_pre_header
      _
    $region3: #{tpu_custom_call.1} parent=1 // loop_header
      %s14 = sphi 0, %s18
      %p15 = scmp.ge.s32.totalorder %s14, 4
      %s24 = sphi 0, %s26
      %s27 = sphi 0, %s24
      %s28 = sphi 0, %s27
      %s44 = sphi 0, %s28
      %s48 = sphi 0, %s48
      %s50 = sphi 0, %s48
      %s51 = sphi 0, %s50
      %s65 = sphi 0, %s51
      %s71 = sphi 0, %s73
      %s74 = sphi 0, %s71
      %s75 = sphi 0, %s74
      %s91 = sphi 0, %s75
    $region4: #{tpu_custom_call.1} parent=1 // loop_header_branch
      %17 = sbr.rel (%p15) target = $region8
    $region5: #{tpu_custom_call.1} parent=1 // loop_body
      %s19 = ssub.s32 %s14, 1
      %s20 = ssub.s32 %s14, 2
      %s21 = sadd.s32 %s14, 1
      %s22 = ssub.s32 %s14, %s21
      %p23 = scmp.eq.s32.totalorder %s22, 0
      %s25 = sadd.s32 %s24, 1
      %s26 = scalar_select %p23, %s24, %s25
      %p29 = pneg %p23
      %p30 = scmp.eq.s32.totalorder %s14, 1
      %p31 = por %p29, %p30
      %p32 = scmp.ne.s32.totalorder %s24, %s27
      %p33 = scmp.eq.s32.totalorder %s14, 0
      %p34 = por %p32, %p33
      %p35 = scmp.ne.s32.totalorder %s24, %s27
      %p36 = scmp.eq.s32.totalorder %s19, 1
      %p37 = por %p35, %p36
      %p38 = scmp.ne.s32.totalorder %s27, %s28
      %p39 = scmp.eq.s32.totalorder %s19, 0
      %p40 = por %p38, %p39
      %p41 = scmp.ne.s32.totalorder %s27, %s28
      %p42 = scmp.eq.s32.totalorder %s20, 1
      %p43 = por %p41, %p42
      %p45 = scmp.ne.s32.totalorder %s28, %s44
      %p46 = scmp.eq.s32.totalorder %s20, 0
      %p47 = por %p45, %p46
      %s49 = sadd.s32 %s48, 1
      %p52 = scmp.eq.s32.totalorder %s14, 1
      %p53 = scmp.ne.s32.totalorder %s48, %s50
      %p54 = scmp.eq.s32.totalorder %s14, 0
      %p55 = por %p53, %p54
      %p56 = scmp.ne.s32.totalorder %s48, %s50
      %p57 = scmp.eq.s32.totalorder %s19, 1
      %p58 = por %p56, %p57
      %p59 = scmp.ne.s32.totalorder %s50, %s51
      %p60 = scmp.eq.s32.totalorder %s19, 0
      %p61 = por %p59, %p60
      %p62 = scmp.ne.s32.totalorder %s50, %s51
      %p63 = scmp.eq.s32.totalorder %s20, 1
      %p64 = por %p62, %p63
      %p66 = scmp.ne.s32.totalorder %s51, %s65
      %p67 = scmp.eq.s32.totalorder %s20, 0
      %p68 = por %p66, %p67
      %s69 = ssub.s32 %s14, %s21
      %p70 = scmp.eq.s32.totalorder %s69, 0
      %s72 = sadd.s32 %s71, 1
      %s73 = scalar_select %p70, %s71, %s72
      %p76 = pneg %p70
      %p77 = scmp.eq.s32.totalorder %s14, 1
      %p78 = por %p76, %p77
      %p79 = scmp.ne.s32.totalorder %s71, %s74
      %p80 = scmp.eq.s32.totalorder %s14, 0
      %p81 = por %p79, %p80
      %p82 = scmp.ne.s32.totalorder %s71, %s74
      %p83 = scmp.eq.s32.totalorder %s19, 1
      %p84 = por %p82, %p83
      %p85 = scmp.ne.s32.totalorder %s74, %s75
      %p86 = scmp.eq.s32.totalorder %s19, 0
      %p87 = por %p85, %p86
      %p88 = scmp.ne.s32.totalorder %s74, %s75
      %p89 = scmp.eq.s32.totalorder %s20, 1
      %p90 = por %p88, %p89
      %p92 = scmp.ne.s32.totalorder %s75, %s91
      %p93 = scmp.eq.s32.totalorder %s20, 0
      %p94 = por %p92, %p93
      %p95 = scmp.le.s32.totalorder 1, %s14
      %p96 = scmp.lt.s32.totalorder %s14, 3
      %p97 = pnand %p95, %p96
      %p98 = pneg %p97
      // Predicated region
      $region9: #{tpu_custom_call.1} parent=5 // pred_check
        _
      $region10: #{tpu_custom_call.1} parent=5 // pred_check_branch
        %100 = sbr.rel (%p97) target = $region12
      $region11: #{tpu_custom_call.1} parent=5 // pred_region
        %s101 = ssub.s32 %s14, 1
        // Predicated region
        $region13: #{tpu_custom_call.1} parent=11 // pred_check
          %p102 = pneg %p61
        $region14: #{tpu_custom_call.1} parent=11 // pred_check_branch
          %104 = sbr.rel (%p102) target = $region16
        $region15: #{tpu_custom_call.1} parent=11 // pred_region
          _
        $region16: #{tpu_custom_call.1} parent=11 // pred_fallthru
          _
      $region12: #{tpu_custom_call.1} parent=5 // pred_fallthru
        _
      %p105 = scmp.lt.s32.totalorder %s14, 2
      // Predicated region
      $region17: #{tpu_custom_call.1} parent=5 // pred_check
        %p106 = pneg %p105
      $region18: #{tpu_custom_call.1} parent=5 // pred_check_branch
        %108 = sbr.rel (%p106) target = $region20
      $region19: #{tpu_custom_call.1} parent=5 // pred_region
        // Predicated region
        $region21: #{tpu_custom_call.1} parent=19 // pred_check
          %p109 = pneg %p34
        $region22: #{tpu_custom_call.1} parent=19 // pred_check_branch
          %111 = sbr.rel (%p109) target = $region24
        $region23: #{tpu_custom_call.1} parent=19 // pred_region
          %s112 = sand.u32 %s24, 1
          %s113 = scalar_lea.sflag [#allocation3], %s112
          %s114 = sand.u32 %s24, 1
          %s115 = smul.addr %s114, 8
          %s116 = scalar_lea.vmem [#allocation2], %s115
          %s118 = ssub.s32 128, 128
          %119 = vsyncadd %s113, %s118
          %s120 = smul.addr %s14, 128
          %s121 = scalar_lea.hbm %s0, %s120
          %s123 = sshll.u32 %s116, 4
          %s124 = int_to_ptr.vmem [resolvable:$true] %s123
          %126 = dma.hbm_to_vmem [thread:$0]  %s121, 128, %s124, %s113
        $region24: #{tpu_custom_call.1} parent=19 // pred_fallthru
          _
      $region20: #{tpu_custom_call.1} parent=5 // pred_fallthru
        _
      %p127 = scmp.le.s32.totalorder 1, %s14
      %p128 = scmp.lt.s32.totalorder %s14, 3
      %p129 = pnand %p127, %p128
      %p130 = pneg %p129
      // Predicated region
      $region25: #{tpu_custom_call.1} parent=5 // pred_check
        _
      $region26: #{tpu_custom_call.1} parent=5 // pred_check_branch
        %132 = sbr.rel (%p129) target = $region28
      $region27: #{tpu_custom_call.1} parent=5 // pred_region
        %s133 = ssub.s32 %s14, 1
        %s134 = sand.u32 %s27, 1
        %s135 = scalar_lea.sflag [#allocation3], %s134
        %s136 = sand.u32 %s27, 1
        %s137 = smul.addr %s136, 8
        %s138 = scalar_lea.vmem [#allocation2], %s137
        // Predicated region
        $region29: #{tpu_custom_call.1} parent=27 // pred_check
          %p139 = pneg %p40
        $region30: #{tpu_custom_call.1} parent=27 // pred_check_branch
          %141 = sbr.rel (%p139) target = $region32
        $region31: #{tpu_custom_call.1} parent=27 // pred_region
          %142 = dma.done %s135, 128
        $region32: #{tpu_custom_call.1} parent=27 // pred_fallthru
          _
        %s143 = sand.u32 %s27, 1
        %s144 = scalar_lea.sflag [#allocation3], %s143
        %s145 = sand.u32 %s27, 1
        %s146 = smul.addr %s145, 8
        %s147 = scalar_lea.vmem [#allocation2], %s146
        %p148 = pneg %p40
        %p149 = pneg %p37
        %p150 = pneg %p61
        %p151 = pneg %p58
        %p152 = pneg %p87
        %p153 = pneg %p84
        %s154 = sand.u32 %s74, 1
        %s155 = scalar_lea.sflag [#allocation4], %s154
        %s156 = sand.u32 %s74, 1
        %s157 = smul.addr %s156, 8
        %s158 = scalar_lea.vmem [#allocation5], %s157
        %v159 = vld [vmem:[%s1] sm:$0x1]
        %v160 = vld [vmem:[%s138] sm:$0xff]
        %v161 = vmul.f32 %v160, %v160
        %162 = vadd.xlane.f32.xlu0 %v161
        %v163 = vpop.xlane.xlu0 %162
        %v164 = vrcp.pop 128.0
        %v165 = vmul.f32 %v163, %v164
        %v166 = vadd.f32 %v165, 1e-06
        %v167 = vrsqrt.pop %v166
        %v168 = vmul.f32 %v160, %v167
        %v170 = vlaneseq
        %v171 = vshrl.u32 %v170, 7
        %v172 = vsub.s32 0, %v171
        %v173 = vrot.slane %v159, %v172
        %v175 = vmul.f32 %v173, %v168
        %176 = vst [vmem:[%s158] sm:$0xff] %v175
        %s177 = sand.u32 %s74, 1
        %s178 = scalar_lea.sflag [#allocation4], %s177
        %s179 = sand.u32 %s74, 1
        %s180 = smul.addr %s179, 8
        %s181 = scalar_lea.vmem [#allocation5], %s180
        // Predicated region
        $region33: #{tpu_custom_call.1} parent=27 // pred_check
          %p182 = pneg %p84
        $region34: #{tpu_custom_call.1} parent=27 // pred_check_branch
          %184 = sbr.rel (%p182) target = $region36
        $region35: #{tpu_custom_call.1} parent=27 // pred_region
          %s186 = ssub.s32 128, 128
          %187 = vsyncadd %s178, %s186
          %s188 = smul.addr %s19, 128
          %s189 = scalar_lea.hbm %s2, %s188
          %s191 = sshll.u32 %s181, 4
          %s192 = int_to_ptr.vmem [resolvable:$true] %s191
          %194 = dma.vmem_to_hbm [thread:$0]  %s192, 128, %s189, %s178
        $region36: #{tpu_custom_call.1} parent=27 // pred_fallthru
          _
      $region28: #{tpu_custom_call.1} parent=5 // pred_fallthru
        _
      %p195 = scmp.le.s32.totalorder 2, %s14
      // Predicated region
      $region37: #{tpu_custom_call.1} parent=5 // pred_check
        %p196 = pneg %p195
      $region38: #{tpu_custom_call.1} parent=5 // pred_check_branch
        %198 = sbr.rel (%p196) target = $region40
      $region39: #{tpu_custom_call.1} parent=5 // pred_region
        %s199 = ssub.s32 %s14, 2
        // Predicated region
        $region41: #{tpu_custom_call.1} parent=39 // pred_check
          %p200 = pneg %p90
        $region42: #{tpu_custom_call.1} parent=39 // pred_check_branch
          %202 = sbr.rel (%p200) target = $region44
        $region43: #{tpu_custom_call.1} parent=39 // pred_region
          %s203 = sand.u32 %s75, 1
          %s204 = scalar_lea.sflag [#allocation4], %s203
          %s205 = sand.u32 %s75, 1
          %s206 = smul.addr %s205, 8
          %s207 = scalar_lea.vmem [#allocation5], %s206
          %208 = dma.done %s204, 128
        $region44: #{tpu_custom_call.1} parent=39 // pred_fallthru
          _
      $region40: #{tpu_custom_call.1} parent=5 // pred_fallthru
        _
    $region6: #{tpu_custom_call.1} parent=1 // loop_footer
      %s18 = sadd.s32 1, %s14
    $region7: #{tpu_custom_call.1} parent=1 // loop_footer_branch
      %13 = sbr.rel target = $region3
    $region8: #{tpu_custom_call.1} parent=1 // loop_exit
      _
    %209 = vsyncpa [#allocation3], 1
    %s210 = scalar_lea.sflag [#allocation3], 1
    %211 = vsyncpa %s210, 1
    %212 = vsyncpa [#allocation4], 1
    %s213 = scalar_lea.sflag [#allocation4], 1
    %214 = vsyncpa %s213, 1

</llo_original>
